<compile_context>
chip_gen: v6e
topology: v6e:2x2x1
jax: 0.10.0
libtpu: 0.0.40
codegen_flags: <defaults>
</compile_context>

<pallas_src>
import jax
import jax.numpy as jnp
from jax.experimental import pallas as pl
from jax.experimental.pallas import tpu as pltpu

_MIB = 1024 * 1024


def _round_up(x, m):
    return ((x + m - 1) // m) * m


def _pad2(a, rows, cols):
    r, c = a.shape
    if r == rows and c == cols:
        return a
    return jnp.pad(a, ((0, rows - r), (0, cols - c)))


def _vmem_budget_bytes():
    """Per-generation VMEM budget = physical capacity minus headroom."""
    try:
        cap = int(pltpu.get_tpu_info().vmem_capacity_bytes)
    except Exception:
        cap = 64 * _MIB  # conservative (v7x-sized) fallback
    return max(cap - 8 * _MIB, 16 * _MIB)


def _pick_tile_ff(d_ff_128, requested):
    """Largest multiple of 128 that divides d_ff_128 and is <= requested."""
    k = d_ff_128 // 128
    req_m = max(1, min(requested // 128, k))
    for m in range(req_m, 0, -1):
        if k % m == 0:
            return 128 * m
    return 128


def _ffn_kernel_acc_into_out(x_ref, w1_ref, b1_ref, w2_ref, b2_ref, o_ref):
    """f32 output: accumulate directly into the (VMEM-resident) output block."""
    ff = pl.program_id(1)

    @pl.when(ff == 0)
    def _():
        o_ref[...] = jnp.broadcast_to(b2_ref[...], o_ref.shape)

    h = jnp.dot(x_ref[...], w1_ref[...], preferred_element_type=jnp.float32)
    h = jnp.maximum(h + b1_ref[...], 0.0)        # bias + ReLU on the f32 result
    h = h.astype(w2_ref.dtype)                   # dropout == identity in eval mode
    o_ref[...] += jnp.dot(h, w2_ref[...], preferred_element_type=jnp.float32)


def _ffn_kernel_scratch_acc(x_ref, w1_ref, b1_ref, w2_ref, b2_ref, o_ref, acc_ref):
    """Non-f32 output: f32 VMEM scratch accumulator, cast on the last ff step."""
    ff = pl.program_id(1)

    @pl.when(ff == 0)
    def _():
        acc_ref[...] = jnp.zeros_like(acc_ref)

    h = jnp.dot(x_ref[...], w1_ref[...], preferred_element_type=jnp.float32)
    h = jnp.maximum(h + b1_ref[...], 0.0)
    h = h.astype(w2_ref.dtype)
    acc_ref[...] += jnp.dot(h, w2_ref[...], preferred_element_type=jnp.float32)

    @pl.when(ff == pl.num_programs(1) - 1)
    def _():
        o_ref[...] = (acc_ref[...] + b2_ref[...]).astype(o_ref.dtype)


def make_positionwise_feed_forward(w1, b1, w2, b2, *, compute_dtype=jnp.bfloat16,
                                   tile_n=None, tile_ff=None):
    """Build a jitted forward fn for y = relu(x @ w1 + b1) @ w2 + b2.

    Weights are stored [in, out] (torch `weight.T`).  Padding / dtype casting of
    the weights happens once here, outside the per-call hot path.
    """
    d_model, d_ff = w1.shape
    assert w2.shape == (d_ff, d_model)

    compute_dtype = jnp.dtype(compute_dtype)
    c_item = compute_dtype.itemsize
    budget = _vmem_budget_bytes()

    if tile_n is None:
        tile_n = 1024 if budget >= 96 * _MIB else 512   # v5e/v6e vs v7x
    if tile_ff is None:
        tile_ff = 512

    d_model_p = _round_up(d_model, 128)
    d_ff_128 = _round_up(d_ff, 128)

    # Weight-resident path: padded weights (double-buffered, compute dtype) fit
    # in ~half the VMEM budget -> single ff slab, weights DMA'd exactly once.
    weight_bytes = 2 * d_model_p * d_ff_128 * c_item
    weights_resident = 2 * weight_bytes <= budget // 2
    tile_ff_sel = d_ff_128 if weights_resident else _pick_tile_ff(d_ff_128, tile_ff)
    d_ff_p = _round_up(d_ff_128, tile_ff_sel)

    # Pad + cast weights ONCE (outside the per-call hot path).
    w1p = _pad2(jnp.asarray(w1, compute_dtype), d_model_p, d_ff_p)
    w2p = _pad2(jnp.asarray(w2, compute_dtype), d_ff_p, d_model_p)
    b1p = _pad2(jnp.asarray(b1, jnp.float32).reshape(1, d_ff), 1, d_ff_p)
    b2p = _pad2(jnp.asarray(b2, jnp.float32).reshape(1, d_model), 1, d_model_p)

    tile_n_req = int(tile_n)

    @jax.jit
    def forward(x):
        B, S, dm = x.shape
        assert dm == d_model
        N = B * S
        out_dtype = x.dtype
        out_item = jnp.dtype(out_dtype).itemsize
        acc_into_out = out_dtype == jnp.float32

        pack = 16 if c_item == 2 else 8        # bf16 packs 16 rows per sublane-pair
        tn = _round_up(min(tile_n_req, _round_up(N, pack)), pack)

        def residency(tn_):
            r = 2 * tn_ * d_model_p * c_item               # x tile (double-buffered)
            r += 2 * tn_ * d_model_p * out_item            # out tile
            r += 2 * d_model_p * tile_ff_sel * c_item      # W1 slab
            r += 2 * tile_ff_sel * d_model_p * c_item      # W2 slab
            r += 2 * (tile_ff_sel + d_model_p) * 4         # biases (f32)
            if not acc_into_out:
                r += tn_ * d_model_p * 4                   # f32 accumulator scratch
            r += 2 * tn_ * tile_ff_sel * (4 + c_item)      # h intermediate headroom
            return r

        # Shrink the row tile until the working set fits the per-gen VMEM budget.
        while residency(tn) > budget and tn > 2 * pack:
            tn = _round_up(max(pack, tn // 2), pack)

        n_p = _round_up(N, tn)
        grid = (n_p // tn, d_ff_p // tile_ff_sel)   # (rows, ff) — reduction axis last
        num_row_tiles = grid[0]

        x2 = _pad2(jnp.asarray(x, compute_dtype).reshape(N, d_model), n_p, d_model_p)

        # Advisory cost estimate reflecting the actual schedule: weight slabs are
        # re-streamed once per row tile unless they are VMEM-resident.
        w_stream = 1 if weights_resident else num_row_tiles
        cost = pl.CostEstimate(
            flops=4 * n_p * d_model_p * d_ff_p,
            transcendentals=0,
            bytes_accessed=(n_p * d_model_p * (c_item + out_item)
                            + w_stream * 2 * d_model_p * d_ff_p * c_item
                            + (d_ff_p + d_model_p) * 4),
        )

        vmem_limit = int(min(max(int(residency(tn) * 1.4), 32 * _MIB), budget))

        in_specs = [
            pl.BlockSpec((tn, d_model_p), lambda i, ff: (i, 0)),            # x rows
            pl.BlockSpec((d_model_p, tile_ff_sel), lambda i, ff: (0, ff)),  # W1 slab
            pl.BlockSpec((1, tile_ff_sel), lambda i, ff: (0, ff)),          # b1 slab
            pl.BlockSpec((tile_ff_sel, d_model_p), lambda i, ff: (ff, 0)),  # W2 slab
            pl.BlockSpec((1, d_model_p), lambda i, ff: (0, 0)),             # b2
        ]
        out_spec = pl.BlockSpec((tn, d_model_p), lambda i, ff: (i, 0))

        if acc_into_out:
            kernel = _ffn_kernel_acc_into_out
            scratch = []
        else:
            kernel = _ffn_kernel_scratch_acc
            scratch = [pltpu.VMEM((tn, d_model_p), jnp.float32)]

        out = pl.pallas_call(
            kernel,
            out_shape=jax.ShapeDtypeStruct((n_p, d_model_p), out_dtype),
            grid_spec=pltpu.PrefetchScalarGridSpec(
                num_scalar_prefetch=0,
                grid=grid,
                in_specs=in_specs,
                out_specs=out_spec,
                scratch_shapes=scratch,
            ),
            compiler_params=pltpu.CompilerParams(
                # TODO(synk): on v7x megacore the two TCs each stream their own
                # copy of streamed weight slabs; staging W1/W2 once in VMEM_SHARED
                # via core_map would halve that traffic (moot when weights are
                # resident, which this plan prefers whenever they fit).
                dimension_semantics=("parallel", "arbitrary"),
                vmem_limit_bytes=vmem_limit,
            ),
            cost_estimate=cost,
        )(x2, w1p, b1p, w2p, b2p)

        return out[:N, :d_model].reshape(B, S, d_model)

    return forward


def _init_params(key, d_model, d_ff, dtype=jnp.float32):
    """Deterministic synthetic params (PyTorch-Linear-like uniform fan-in init)."""
    k1, k2, k3, k4 = jax.random.split(key, 4)
    bound1 = 1.0 / (d_model ** 0.5)
    bound2 = 1.0 / (d_ff ** 0.5)
    # stored transposed relative to torch ([in, out]) so kernel does x @ W
    w1 = jax.random.uniform(k1, (d_model, d_ff), dtype, -bound1, bound1)
    b1 = jax.random.uniform(k2, (d_ff,), dtype, -bound1, bound1)
    w2 = jax.random.uniform(k3, (d_ff, d_model), dtype, -bound2, bound2)
    b2 = jax.random.uniform(k4, (d_model,), dtype, -bound2, bound2)
    return w1, b1, w2, b2


if __name__ == "__main__":
    key = jax.random.PRNGKey(0)
    kx, kp = jax.random.split(key)

    B, S, d_model, d_ff = 2, 8, 32, 64
    x = jax.random.normal(kx, (B, S, d_model), jnp.float32)
    w1, b1, w2, b2 = _init_params(kp, d_model, d_ff)

    # Pure-JAX reference (eval-mode dropout == identity)
    ref = jnp.maximum(x @ w1 + b1, 0.0) @ w2 + b2

    # f32 compute path: bit-accurate check against the PyTorch-style reference.
    ffn_f32 = make_positionwise_feed_forward(w1, b1, w2, b2, compute_dtype=jnp.float32)
    y32 = jax.block_until_ready(ffn_f32(x))
    assert y32.shape == (B, S, d_model)
    assert jnp.allclose(y32, ref, atol=1e-5, rtol=1e-5), float(jnp.max(jnp.abs(y32 - ref)))

    # bf16 compute path (recommended on TPU): f32 accumulation, looser tolerance.
    ffn_bf16 = make_positionwise_feed_forward(w1, b1, w2, b2, compute_dtype=jnp.bfloat16)
    y16 = jax.block_until_ready(ffn_bf16(x))
    assert y16.shape == (B, S, d_model)
    assert jnp.allclose(y16, ref, atol=5e-2, rtol=5e-2), float(jnp.max(jnp.abs(y16 - ref)))

    print("KERNEL_OK")
</pallas_src>

<mosaic_0001>
module attributes {stable_mosaic.version = 11 : i64} {
  func.func @_ffn_kernel_acc_into_out(%arg0: i32, %arg1: i32, %arg2: memref<16x128xf32, #tpu.memory_space<vmem>>, %arg3: memref<128x128xf32, #tpu.memory_space<vmem>>, %arg4: memref<1x128xf32, #tpu.memory_space<vmem>>, %arg5: memref<128x128xf32, #tpu.memory_space<vmem>>, %arg6: memref<1x128xf32, #tpu.memory_space<vmem>>, %arg7: memref<16x128xf32, #tpu.memory_space<vmem>>) attributes {dimension_semantics = [#tpu.dimension_semantics<parallel>, #tpu.dimension_semantics<arbitrary>], iteration_bounds = array<i64: 1, 1>, scalar_prefetch = 0 : i64, scratch_operands = 0 : i64, tpu.core_type = #tpu.core_type<tc>, window_params = [{transform_indices = @transform_0, window_bounds = array<i64: 16, 128>}, {transform_indices = @transform_1, window_bounds = array<i64: 128, 128>}, {transform_indices = @transform_2, window_bounds = array<i64: 1, 128>}, {transform_indices = @transform_3, window_bounds = array<i64: 128, 128>}, {pipeline_mode = #tpu.pipeline_mode<synchronous>, transform_indices = @transform_4, window_bounds = array<i64: 1, 128>}, {transform_indices = @transform_5, window_bounds = array<i64: 16, 128>}]} {
    %c0_i32 = arith.constant 0 : i32
    %0 = arith.cmpi eq, %arg1, %c0_i32 : i32
    %1 = arith.extui %0 : i1 to i32
    %c0_i32_0 = arith.constant 0 : i32
    %2 = arith.cmpi ne, %1, %c0_i32_0 : i32
    scf.if %2 {
      %c0_14 = arith.constant 0 : index
      %c0_15 = arith.constant 0 : index
      %16 = vector.load %arg6[%c0_14, %c0_15] : memref<1x128xf32, #tpu.memory_space<vmem>>, vector<1x128xf32>
      %17 = vector.shape_cast %16 : vector<1x128xf32> to vector<1x128xf32>
      %18 = vector.broadcast %17 : vector<1x128xf32> to vector<16x128xf32>
      %c0_16 = arith.constant 0 : index
      %c0_17 = arith.constant 0 : index
      %19 = vector.load %arg7[%c0_16, %c0_17] : memref<16x128xf32, #tpu.memory_space<vmem>>, vector<16x128xf32>
      tpu.vector_store %arg7[%c0_16, %c0_17], %18 {strides = array<i32>} : memref<16x128xf32, #tpu.memory_space<vmem>>, vector<16x128xf32>,
    } else {
    }
    %c0 = arith.constant 0 : index
    %c0_1 = arith.constant 0 : index
    %3 = vector.load %arg2[%c0, %c0_1] : memref<16x128xf32, #tpu.memory_space<vmem>>, vector<16x128xf32>
    %c0_2 = arith.constant 0 : index
    %c0_3 = arith.constant 0 : index
    %4 = vector.load %arg3[%c0_2, %c0_3] : memref<128x128xf32, #tpu.memory_space<vmem>>, vector<128x128xf32>
    %cst = arith.constant dense<0.000000e+00> : vector<16x128xf32>
    %5 = tpu.matmul %3, %4, %cst {dimension_numbers = #tpu.dot_dimension_numbers<[1], [0], [0], [1], [0, 0, 1, 1], [], []>} : vector<16x128xf32>, vector<128x128xf32>, vector<16x128xf32> -> vector<16x128xf32>
    %c0_4 = arith.constant 0 : index
    %c0_5 = arith.constant 0 : index
    %6 = vector.load %arg4[%c0_4, %c0_5] : memref<1x128xf32, #tpu.memory_space<vmem>>, vector<1x128xf32>
    %7 = vector.broadcast %6 : vector<1x128xf32> to vector<16x128xf32>
    %8 = arith.addf %5, %7 : vector<16x128xf32>
    %cst_6 = arith.constant 0.000000e+00 : f32
    %9 = vector.broadcast %cst_6 : f32 to vector<16x128xf32>
    %10 = arith.maximumf %8, %9 : vector<16x128xf32>
    %c0_7 = arith.constant 0 : index
    %c0_8 = arith.constant 0 : index
    %11 = vector.load %arg7[%c0_7, %c0_8] : memref<16x128xf32, #tpu.memory_space<vmem>>, vector<16x128xf32>
    %c0_9 = arith.constant 0 : index
    %c0_10 = arith.constant 0 : index
    %12 = vector.load %arg5[%c0_9, %c0_10] : memref<128x128xf32, #tpu.memory_space<vmem>>, vector<128x128xf32>
    %cst_11 = arith.constant dense<0.000000e+00> : vector<16x128xf32>
    %13 = tpu.matmul %10, %12, %cst_11 {dimension_numbers = #tpu.dot_dimension_numbers<[1], [0], [0], [1], [0, 0, 1, 1], [], []>} : vector<16x128xf32>, vector<128x128xf32>, vector<16x128xf32> -> vector<16x128xf32>
    %14 = arith.addf %11, %13 : vector<16x128xf32>
    %c0_12 = arith.constant 0 : index
    %c0_13 = arith.constant 0 : index
    %15 = vector.load %arg7[%c0_12, %c0_13] : memref<16x128xf32, #tpu.memory_space<vmem>>, vector<16x128xf32>
    tpu.vector_store %arg7[%c0_12, %c0_13], %14 {strides = array<i32>} : memref<16x128xf32, #tpu.memory_space<vmem>>, vector<16x128xf32>,
    return
  }
  func.func @transform_0(%arg0: i32, %arg1: i32) -> (i32, i32) {
    %c0_i32 = arith.constant 0 : i32
    %c0_i32_0 = arith.constant 0 : i32
    return %arg0, %c0_i32 : i32, i32
  }
  func.func @transform_1(%arg0: i32, %arg1: i32) -> (i32, i32) {
    %c0_i32 = arith.constant 0 : i32
    %c0_i32_0 = arith.constant 0 : i32
    return %c0_i32, %arg1 : i32, i32
  }
  func.func @transform_2(%arg0: i32, %arg1: i32) -> (i32, i32) {
    %c0_i32 = arith.constant 0 : i32
    %c0_i32_0 = arith.constant 0 : i32
    return %c0_i32, %arg1 : i32, i32
  }
  func.func @transform_3(%arg0: i32, %arg1: i32) -> (i32, i32) {
    %c0_i32 = arith.constant 0 : i32
    %c0_i32_0 = arith.constant 0 : i32
    return %arg1, %c0_i32 : i32, i32
  }
  func.func @transform_4(%arg0: i32, %arg1: i32) -> (i32, i32) {
    %c0_i32 = arith.constant 0 : i32
    %c0_i32_0 = arith.constant 0 : i32
    %c0_i32_1 = arith.constant 0 : i32
    return %c0_i32, %c0_i32_0 : i32, i32
  }
  func.func @transform_5(%arg0: i32, %arg1: i32) -> (i32, i32) {
    %c0_i32 = arith.constant 0 : i32
    %c0_i32_0 = arith.constant 0 : i32
    return %arg0, %c0_i32 : i32, i32
  }
}

</mosaic_0001>

<llo_original>
// kernel: forward.1
$region0: #{forward.1}
  #allocation0 [shape = 'u32[]', space=smem, size = 0x4, offset = 0x4, fixed_abs, tag = 'smem constant byte address 0x4 - core index']
  #allocation1 [shape = 'u32[144,128]{1,0:T(1,128)}', space=vmem, size = 0x12000, scoped, tag = 'internal scratch']
  %s0 = inlined_call_operand.vmem [shape: f32[16,128], index: 0, kind: input, shape index: {}]
  %s1 = inlined_call_operand.hbm [shape: f32[128,128], index: 1, kind: input, shape index: {}]
  %s2 = inlined_call_operand.vmem [shape: f32[1,128], index: 2, kind: input, shape index: {}]
  %s3 = inlined_call_operand.hbm [shape: f32[128,128], index: 3, kind: input, shape index: {}]
  %s4 = inlined_call_operand.vmem [shape: f32[1,128], index: 4, kind: input, shape index: {}]
  %s5 = inlined_call_operand.vmem [shape: f32[16,128], index: 5, kind: output, shape index: {}]
  %s6 = sld [smem:[#allocation0]]
  $region42: #{forward.1} parent=0
    _
  %s8 = ssub.s32 1, %s6
  %s9 = scalar_select 0, %s8, %s6
  $region1: #{forward.1} parent=0
    #allocation2 [shape = 'u8[65536]{0}', space=vmem, size = 0x10000, scoped, tag = 'input window, operand 1, single buffered']
    #allocation3 [shape = 's32[1]{0}', space=sflag, size = 0x4, scoped, tag = 'scoped memory for forward.1']
    #allocation4 [shape = 'u8[65536]{0}', space=vmem, size = 0x10000, scoped, tag = 'input window, operand 3, single buffered']
    #allocation5 [shape = 's32[1]{0}', space=sflag, size = 0x4, scoped, tag = 'scoped memory for forward.1']
    %10 = vsyncpa [#allocation3], 0
    %11 = vsyncpa [#allocation5], 0
    // Predicated region
    $region2: #{forward.1} parent=1 // pred_check
      _
    $region3: #{forward.1} parent=1 // pred_check_branch
      %13 = sbr.rel (0) target = $region5
    $region4: #{forward.1} parent=1 // pred_region
      _
    $region5: #{forward.1} parent=1 // pred_fallthru
      _
    // Predicated region
    $region6: #{forward.1} parent=1 // pred_check
      _
    $region7: #{forward.1} parent=1 // pred_check_branch
      %15 = sbr.rel (0) target = $region9
    $region8: #{forward.1} parent=1 // pred_region
      %s17 = ssub.s32 2048, 2048
      %18 = vsyncadd [#allocation3], %s17
      %s19 = sshll.u32 [#allocation2], 4
      %s20 = int_to_ptr.vmem [resolvable:$true] %s19
      %25 = dma.hbm_to_vmem [thread:$0]  %s1, 2048, %s20, [#allocation3], 128, 128, 8
    $region9: #{forward.1} parent=1 // pred_fallthru
      _
    // Predicated region
    $region10: #{forward.1} parent=1 // pred_check
      _
    $region11: #{forward.1} parent=1 // pred_check_branch
      %27 = sbr.rel (0) target = $region13
    $region12: #{forward.1} parent=1 // pred_region
      _
    $region13: #{forward.1} parent=1 // pred_fallthru
      _
    // Predicated region
    $region14: #{forward.1} parent=1 // pred_check
      _
    $region15: #{forward.1} parent=1 // pred_check_branch
      %29 = sbr.rel (0) target = $region17
    $region16: #{forward.1} parent=1 // pred_region
      %s31 = ssub.s32 2048, 2048
      %32 = vsyncadd [#allocation5], %s31
      %s33 = sshll.u32 [#allocation4], 4
      %s34 = int_to_ptr.vmem [resolvable:$true] %s33
      %39 = dma.hbm_to_vmem [thread:$0]  %s3, 2048, %s34, [#allocation5], 128, 128, 8
    $region17: #{forward.1} parent=1 // pred_fallthru
      _
    // Predicated region
    $region18: #{forward.1} parent=1 // pred_check
      _
    $region19: #{forward.1} parent=1 // pred_check_branch
      %41 = sbr.rel (0) target = $region21
    $region20: #{forward.1} parent=1 // pred_region
      _
    $region21: #{forward.1} parent=1 // pred_fallthru
      _
    // Predicated region
    $region22: #{forward.1} parent=1 // pred_check
      _
    $region23: #{forward.1} parent=1 // pred_check_branch
      %43 = sbr.rel (0) target = $region25
    $region24: #{forward.1} parent=1 // pred_region
      %44 = dma.done [#allocation3], 2048
    $region25: #{forward.1} parent=1 // pred_fallthru
      _
    // Predicated region
    $region26: #{forward.1} parent=1 // pred_check
      _
    $region27: #{forward.1} parent=1 // pred_check_branch
      %46 = sbr.rel (0) target = $region29
    $region28: #{forward.1} parent=1 // pred_region
      %47 = dma.done [#allocation5], 2048
    $region29: #{forward.1} parent=1 // pred_fallthru
      _
    %p48 = scmp.eq.s32.totalorder 0, 0
    // Predicated region
    $region30: #{forward.1} parent=1 // pred_check
      %p49 = pneg %p48
    $region31: #{forward.1} parent=1 // pred_check_branch
      %51 = sbr.rel (%p49) target = $region33
    $region32: #{forward.1} parent=1 // pred_region
      %v52 = vld [vmem:[%s4] sm:$0x1]
      %v54 = vlaneseq
      %v55 = vshrl.u32 %v54, 7
      %v56 = vsub.s32 0, %v55
      %v57 = vrot.slane %v52, %v56
      %59 = vst [vmem:[%s5] sm:$0xff] %v57
      %60 = vst [vmem:[%s5 + $0x8] sm:$0xff] %v57
    $region33: #{forward.1} parent=1 // pred_fallthru
      _
    %v61 = vld [vmem:[%s0] sm:$0xff]
    %v62 = vld [vmem:[%s0 + $0x8] sm:$0xff]
    %v63 = vld [vmem:[#allocation2] sm:$0xff]
    %v64 = vld [vmem:[#allocation2 + $0x8] sm:$0xff]
    %v65 = vld [vmem:[#allocation2 + $0x10] sm:$0xff]
    %v66 = vld [vmem:[#allocation2 + $0x18] sm:$0xff]
    %v67 = vld [vmem:[#allocation2 + $0x20] sm:$0xff]
    %v68 = vld [vmem:[#allocation2 + $0x28] sm:$0xff]
    %v69 = vld [vmem:[#allocation2 + $0x30] sm:$0xff]
    %v70 = vld [vmem:[#allocation2 + $0x38] sm:$0xff]
    %v71 = vld [vmem:[#allocation2 + $0x40] sm:$0xff]
    %v72 = vld [vmem:[#allocation2 + $0x48] sm:$0xff]
    %v73 = vld [vmem:[#allocation2 + $0x50] sm:$0xff]
    %v74 = vld [vmem:[#allocation2 + $0x58] sm:$0xff]
    %v75 = vld [vmem:[#allocation2 + $0x60] sm:$0xff]
    %v76 = vld [vmem:[#allocation2 + $0x68] sm:$0xff]
    %v77 = vld [vmem:[#allocation2 + $0x70] sm:$0xff]
    %v78 = vld [vmem:[#allocation2 + $0x78] sm:$0xff]
    %v79 = vld [vmem:[%s2] sm:$0x1]
    %v81 = vlaneseq
    %v82 = vshrl.u32 %v81, 7
    %v83 = vsub.s32 0, %v82
    %v84 = vrot.slane %v79, %v83
    %86 = vmatprep.subr.mxu0 0.0
    %87 = vmatpush1.msra.mxu0 %v78
    %88 = vmatprep.subr.mxu0 0.0
    %89 = vmatpush1.msra.mxu0 %v77
    %90 = vmatprep.subr.mxu0 0.0
    %91 = vmatpush1.msra.mxu0 %v76
    %92 = vmatprep.subr.mxu0 0.0
    %93 = vmatpush1.msra.mxu0 %v75
    %94 = vmatprep.subr.mxu0 0.0
    %95 = vmatpush1.msra.mxu0 %v74
    %96 = vmatprep.subr.mxu0 0.0
    %97 = vmatpush1.msra.mxu0 %v73
    %98 = vmatprep.subr.mxu0 0.0
    %99 = vmatpush1.msra.mxu0 %v72
    %100 = vmatprep.subr.mxu0 0.0
    %101 = vmatpush1.msra.mxu0 %v71
    %102 = vmatprep.subr.mxu0 0.0
    %103 = vmatpush1.msra.mxu0 %v70
    %104 = vmatprep.subr.mxu0 0.0
    %105 = vmatpush1.msra.mxu0 %v69
    %106 = vmatprep.subr.mxu0 0.0
    %107 = vmatpush1.msra.mxu0 %v68
    %108 = vmatprep.subr.mxu0 0.0
    %109 = vmatpush1.msra.mxu0 %v67
    %110 = vmatprep.subr.mxu0 0.0
    %111 = vmatpush1.msra.mxu0 %v66
    %112 = vmatprep.subr.mxu0 0.0
    %113 = vmatpush1.msra.mxu0 %v65
    %114 = vmatprep.subr.mxu0 0.0
    %115 = vmatpush1.msra.mxu0 %v64
    %116 = vmatprep.subr.mxu0 0.0
    %117 = vmatpush1.msra.mxu0 %v63
    %118 = vmatprep.subr.mxu0 0.0
    %119 = vmatpush2.msra.mxu0 0.0
    %120 = vmatprep.subr.mxu0 0.0
    %121 = vmatpush2.msra.mxu0 0.0
    %122 = vmatprep.subr.mxu0 0.0
    %123 = vmatpush2.msra.mxu0 0.0
    %124 = vmatprep.subr.mxu0 0.0
    %125 = vmatpush2.msra.mxu0 0.0
    %126 = vmatprep.subr.mxu0 0.0
    %127 = vmatpush2.msra.mxu0 0.0
    %128 = vmatprep.subr.mxu0 0.0
    %129 = vmatpush2.msra.mxu0 0.0
    %130 = vmatprep.subr.mxu0 0.0
    %131 = vmatpush2.msra.mxu0 0.0
    %132 = vmatprep.subr.mxu0 0.0
    %133 = vmatpush2.msra.mxu0 0.0
    %134 = vmatprep.subr.mxu0 0.0
    %135 = vmatpush2.msra.mxu0 0.0
    %136 = vmatprep.subr.mxu0 0.0
    %137 = vmatpush2.msra.mxu0 0.0
    %138 = vmatprep.subr.mxu0 0.0
    %139 = vmatpush2.msra.mxu0 0.0
    %140 = vmatprep.subr.mxu0 0.0
    %141 = vmatpush2.msra.mxu0 0.0
    %142 = vmatprep.subr.mxu0 0.0
    %143 = vmatpush2.msra.mxu0 0.0
    %144 = vmatprep.subr.mxu0 0.0
    %145 = vmatpush2.msra.mxu0 0.0
    %146 = vmatprep.subr.mxu0 0.0
    %147 = vmatpush2.msra.mxu0 0.0
    %148 = vmatprep.subr.mxu0 0.0
    %149 = vmatpush2.msra.mxu0 0.0
    %150 = vmatprep.mubr.f32.mxu0 0.0
    %151 = vmatmul.mubr.f32.gmra.mxu0 %v61
    %v152 = vpop.f32.mrf.mxu0
    %v153 = vadd.f32 %v84, %v152
    %v154 = vpop.f32.mrf.mxu0
    %155 = vmatprep.mubr.f32.mxu0 0.0
    %156 = vmatmul.mubr.f32.gmra.mxu0 %v62
    %v157 = vpop.f32.mrf.mxu0
    %v158 = vadd.f32 %v84, %v157
    %v159 = vpop.f32.mrf.mxu0
    %160 = vdwg.mxu0
    %v161 = vmax.f32 %v153, 0.0
    %v162 = vmax.f32 %v158, 0.0
    %v163 = vld [vmem:[%s5] sm:$0xff]
    %v164 = vld [vmem:[%s5 + $0x8] sm:$0xff]
    %v165 = vld [vmem:[#allocation4] sm:$0xff]
    %v166 = vld [vmem:[#allocation4 + $0x8] sm:$0xff]
    %v167 = vld [vmem:[#allocation4 + $0x10] sm:$0xff]
    %v168 = vld [vmem:[#allocation4 + $0x18] sm:$0xff]
    %v169 = vld [vmem:[#allocation4 + $0x20] sm:$0xff]
    %v170 = vld [vmem:[#allocation4 + $0x28] sm:$0xff]
    %v171 = vld [vmem:[#allocation4 + $0x30] sm:$0xff]
    %v172 = vld [vmem:[#allocation4 + $0x38] sm:$0xff]
    %v173 = vld [vmem:[#allocation4 + $0x40] sm:$0xff]
    %v174 = vld [vmem:[#allocation4 + $0x48] sm:$0xff]
    %v175 = vld [vmem:[#allocation4 + $0x50] sm:$0xff]
    %v176 = vld [vmem:[#allocation4 + $0x58] sm:$0xff]
    %v177 = vld [vmem:[#allocation4 + $0x60] sm:$0xff]
    %v178 = vld [vmem:[#allocation4 + $0x68] sm:$0xff]
    %v179 = vld [vmem:[#allocation4 + $0x70] sm:$0xff]
    %v180 = vld [vmem:[#allocation4 + $0x78] sm:$0xff]
    %181 = vmatprep.subr.mxu0 0.0
    %182 = vmatpush1.msra.mxu0 %v180
    %183 = vmatprep.subr.mxu0 0.0
    %184 = vmatpush1.msra.mxu0 %v179
    %185 = vmatprep.subr.mxu0 0.0
    %186 = vmatpush1.msra.mxu0 %v178
    %187 = vmatprep.subr.mxu0 0.0
    %188 = vmatpush1.msra.mxu0 %v177
    %189 = vmatprep.subr.mxu0 0.0
    %190 = vmatpush1.msra.mxu0 %v176
    %191 = vmatprep.subr.mxu0 0.0
    %192 = vmatpush1.msra.mxu0 %v175
    %193 = vmatprep.subr.mxu0 0.0
    %194 = vmatpush1.msra.mxu0 %v174
    %195 = vmatprep.subr.mxu0 0.0
    %196 = vmatpush1.msra.mxu0 %v173
    %197 = vmatprep.subr.mxu0 0.0
    %198 = vmatpush1.msra.mxu0 %v172
    %199 = vmatprep.subr.mxu0 0.0
    %200 = vmatpush1.msra.mxu0 %v171
    %201 = vmatprep.subr.mxu0 0.0
    %202 = vmatpush1.msra.mxu0 %v170
    %203 = vmatprep.subr.mxu0 0.0
    %204 = vmatpush1.msra.mxu0 %v169
    %205 = vmatprep.subr.mxu0 0.0
    %206 = vmatpush1.msra.mxu0 %v168
    %207 = vmatprep.subr.mxu0 0.0
    %208 = vmatpush1.msra.mxu0 %v167
    %209 = vmatprep.subr.mxu0 0.0
    %210 = vmatpush1.msra.mxu0 %v166
    %211 = vmatprep.subr.mxu0 0.0
    %212 = vmatpush1.msra.mxu0 %v165
    %213 = vmatprep.subr.mxu0 0.0
    %214 = vmatpush2.msra.mxu0 0.0
    %215 = vmatprep.subr.mxu0 0.0
    %216 = vmatpush2.msra.mxu0 0.0
    %217 = vmatprep.subr.mxu0 0.0
    %218 = vmatpush2.msra.mxu0 0.0
    %219 = vmatprep.subr.mxu0 0.0
    %220 = vmatpush2.msra.mxu0 0.0
    %221 = vmatprep.subr.mxu0 0.0
    %222 = vmatpush2.msra.mxu0 0.0
    %223 = vmatprep.subr.mxu0 0.0
    %224 = vmatpush2.msra.mxu0 0.0
    %225 = vmatprep.subr.mxu0 0.0
    %226 = vmatpush2.msra.mxu0 0.0
    %227 = vmatprep.subr.mxu0 0.0
    %228 = vmatpush2.msra.mxu0 0.0
    %229 = vmatprep.subr.mxu0 0.0
    %230 = vmatpush2.msra.mxu0 0.0
    %231 = vmatprep.subr.mxu0 0.0
    %232 = vmatpush2.msra.mxu0 0.0
    %233 = vmatprep.subr.mxu0 0.0
    %234 = vmatpush2.msra.mxu0 0.0
    %235 = vmatprep.subr.mxu0 0.0
    %236 = vmatpush2.msra.mxu0 0.0
    %237 = vmatprep.subr.mxu0 0.0
    %238 = vmatpush2.msra.mxu0 0.0
    %239 = vmatprep.subr.mxu0 0.0
    %240 = vmatpush2.msra.mxu0 0.0
    %241 = vmatprep.subr.mxu0 0.0
    %242 = vmatpush2.msra.mxu0 0.0
    %243 = vmatprep.subr.mxu0 0.0
    %244 = vmatpush2.msra.mxu0 0.0
    %245 = vmatprep.mubr.f32.mxu0 0.0
    %246 = vmatmul.mubr.f32.gmra.mxu0 %v161
    %v247 = vpop.f32.mrf.mxu0
    %v248 = vadd.f32 0.0, %v247
    %v249 = vpop.f32.mrf.mxu0
    %250 = vmatprep.mubr.f32.mxu0 0.0
    %251 = vmatmul.mubr.f32.gmra.mxu0 %v162
    %v252 = vpop.f32.mrf.mxu0
    %v253 = vadd.f32 0.0, %v252
    %v254 = vpop.f32.mrf.mxu0
    %255 = vdwg.mxu0
    %v256 = vadd.f32 %v163, %v248
    %v257 = vadd.f32 %v164, %v253
    %258 = vst [vmem:[%s5] sm:$0xff] %v256
    %259 = vst [vmem:[%s5 + $0x8] sm:$0xff] %v257
    // Predicated region
    $region34: #{forward.1} parent=1 // pred_check
      _
    $region35: #{forward.1} parent=1 // pred_check_branch
      %261 = sbr.rel (0) target = $region37
    $region36: #{forward.1} parent=1 // pred_region
      _
    $region37: #{forward.1} parent=1 // pred_fallthru
      _
    // Predicated region
    $region38: #{forward.1} parent=1 // pred_check
      _
    $region39: #{forward.1} parent=1 // pred_check_branch
      %263 = sbr.rel (0) target = $region41
    $region40: #{forward.1} parent=1 // pred_region
      _
    $region41: #{forward.1} parent=1 // pred_fallthru
      _
    %264 = vsyncpa [#allocation3], 1
    %265 = vsyncpa [#allocation5], 1

</llo_original>
